<compile_context>
chip_gen: v6e
topology: v6e:2x2x1
jax: 0.10.0
libtpu: 0.0.40
codegen_flags: <defaults>
</compile_context>

<pallas_src>
import jax
import jax.numpy as jnp
from jax import lax
from jax.experimental import pallas as pl
from jax.experimental.pallas import tpu as pltpu


def depthwise_conv2d_pallas(x, w, b, depth_multiplier):
    """x: (N, C, H, W) f32; w: (C*D, 1, KH, KW) f32; b: (C*D,) f32."""
    N, C, H, W = x.shape
    C_out, _, KH, KW = w.shape
    assert C_out == C * depth_multiplier
    HO, WO = H - KH + 1, W - KW + 1     # stride=1, padding=0 (VALID)
    HW = H * W
    T = KH * KW
    # Largest flat tap offset; pad the flattened plane so every shifted
    # HW-wide window stays in bounds, rounded to a multiple of 128 lanes.
    s_max = (KH - 1) * W + (KW - 1)
    HWP = ((HW + s_max + 127) // 128) * 128

    # Expand input channels so output channel co has its own sublane row
    # (co -> input channel co // depth_multiplier), flatten spatial to lanes,
    # zero-pad the lane axis. All of this is cheap wrapper-side XLA.
    x_flat = jnp.repeat(x, depth_multiplier, axis=1).reshape(N, C_out, HW)
    x_flat = jnp.pad(x_flat, ((0, 0), (0, 0), (0, HWP - HW)))
    w_tap = w.reshape(C_out, T).astype(jnp.float32)   # (C_out, KH*KW)
    b_col = b.reshape(C_out, 1).astype(jnp.float32)   # (C_out, 1)

    def kernel(x_ref, w_ref, b_ref, o_ref):
        # x_ref: (1, C_out, HWP)  flattened, channel-expanded input plane
        # w_ref: (C_out, T)       resident taps
        # b_ref: (C_out, 1)       resident bias column
        # o_ref: (1, C_out, HW)   lane-dense flat output
        acc = jnp.zeros((C_out, HW), jnp.float32)
        for kh in range(KH):                      # static unrolled tap loop
            for kw in range(KW):
                s = kh * W + kw                   # flat shift for this tap
                t = kh * KW + kw
                window = x_ref[0, :, s:s + HW]    # (C_out, HW), lane-dense
                tap = w_ref[:, t:t + 1]           # (C_out, 1) lane-broadcast
                acc = acc + window * tap
        o_ref[0, :, :] = (acc + b_ref[...]).astype(o_ref.dtype)

    out_flat = pl.pallas_call(
        kernel,
        out_shape=jax.ShapeDtypeStruct((N, C_out, HW), x.dtype),
        grid_spec=pltpu.PrefetchScalarGridSpec(
            num_scalar_prefetch=0,
            grid=(N,),
            in_specs=[
                pl.BlockSpec((1, C_out, HWP), lambda n: (n, 0, 0)),
                pl.BlockSpec((C_out, T), lambda n: (0, 0)),   # resident
                pl.BlockSpec((C_out, 1), lambda n: (0, 0)),   # resident
            ],
            out_specs=pl.BlockSpec((1, C_out, HW), lambda n: (n, 0, 0)),
        ),
        compiler_params=pltpu.CompilerParams(
            dimension_semantics=("parallel",)),
    )(x_flat, w_tap, b_col)

    # Valid outputs live at flat positions ho*W + wo with ho < HO, wo < WO;
    # drop the rest (plain XLA slice, no kernel work).
    out = out_flat.reshape(N, C_out, H, W)[:, :, :HO, :WO]
    return out


def depthwise_conv2d_ref(x, w, b):
    """Pure-JAX reference (grouped conv, groups = in_channels)."""
    C = x.shape[1]
    y = lax.conv_general_dilated(
        x, w, window_strides=(1, 1), padding="VALID",
        feature_group_count=C,
        dimension_numbers=("NCHW", "OIHW", "NCHW"))
    return y + b.reshape(1, -1, 1, 1)


if __name__ == "__main__":
    # Module config (depthwise use-case of the wrapper):
    #   in_channels=4, kernel_size=(3,3), depth_multiplier=2,
    #   groups=in_channels, stride=1, padding=0, bias=True.
    N, C, H, W = 2, 4, 16, 16
    KH, KW = 3, 3
    DEPTH_MULT = 2
    C_OUT = C * DEPTH_MULT

    key = jax.random.PRNGKey(0)
    kx, kw_, kb = jax.random.split(key, 3)
    x = jax.random.normal(kx, (N, C, H, W), dtype=jnp.float32)
    # Conv2d weight shape for depthwise: (C*D, 1, KH, KW)
    w = jax.random.normal(kw_, (C_OUT, 1, KH, KW), dtype=jnp.float32) * 0.1
    b = jax.random.normal(kb, (C_OUT,), dtype=jnp.float32) * 0.1

    y = depthwise_conv2d_pallas(x, w, b, DEPTH_MULT)
    y = jax.block_until_ready(y)

    y_ref = depthwise_conv2d_ref(x, w, b)
    assert y.shape == (N, C_OUT, H - KH + 1, W - KW + 1), y.shape
    assert jnp.allclose(y, y_ref, atol=1e-5, rtol=1e-5), \
        float(jnp.max(jnp.abs(y - y_ref)))

    print("KERNEL_OK")
</pallas_src>

<mosaic_0001>
module attributes {stable_mosaic.version = 11 : i64} {
  func.func @kernel(%arg0: i32, %arg1: memref<1x8x384xf32, #tpu.memory_space<vmem>>, %arg2: memref<8x9xf32, #tpu.memory_space<vmem>>, %arg3: memref<8x1xf32, #tpu.memory_space<vmem>>, %arg4: memref<1x8x256xf32, #tpu.memory_space<vmem>>) attributes {dimension_semantics = [#tpu.dimension_semantics<parallel>], iteration_bounds = array<i64: 2>, scalar_prefetch = 0 : i64, scratch_operands = 0 : i64, tpu.core_type = #tpu.core_type<tc>, window_params = [{transform_indices = @transform_0, window_bounds = array<i64: 1, 8, 384>}, {pipeline_mode = #tpu.pipeline_mode<synchronous>, transform_indices = @transform_1, window_bounds = array<i64: 8, 9>}, {pipeline_mode = #tpu.pipeline_mode<synchronous>, transform_indices = @transform_2, window_bounds = array<i64: 8, 1>}, {transform_indices = @transform_3, window_bounds = array<i64: 1, 8, 256>}]} {
    %cst = arith.constant 0.000000e+00 : f32
    %0 = vector.broadcast %cst : f32 to vector<8x256xf32>
    %c0 = arith.constant 0 : index
    %c0_0 = arith.constant 0 : index
    %c0_1 = arith.constant 0 : index
    %1 = vector.load %arg1[%c0, %c0_0, %c0_1] : memref<1x8x384xf32, #tpu.memory_space<vmem>>, vector<1x8x256xf32>
    %2 = vector.shape_cast %1 : vector<1x8x256xf32> to vector<8x256xf32>
    %c0_2 = arith.constant 0 : index
    %c0_3 = arith.constant 0 : index
    %3 = vector.load %arg2[%c0_2, %c0_3] : memref<8x9xf32, #tpu.memory_space<vmem>>, vector<8x1xf32>
    %4 = vector.broadcast %3 : vector<8x1xf32> to vector<8x256xf32>
    %5 = arith.mulf %2, %4 : vector<8x256xf32>
    %6 = arith.addf %0, %5 : vector<8x256xf32>
    %c0_4 = arith.constant 0 : index
    %c0_5 = arith.constant 0 : index
    %c1 = arith.constant 1 : index
    %7 = vector.load %arg1[%c0_4, %c0_5, %c1] : memref<1x8x384xf32, #tpu.memory_space<vmem>>, vector<1x8x256xf32>
    %8 = vector.shape_cast %7 : vector<1x8x256xf32> to vector<8x256xf32>
    %c0_6 = arith.constant 0 : index
    %c1_7 = arith.constant 1 : index
    %9 = vector.load %arg2[%c0_6, %c1_7] : memref<8x9xf32, #tpu.memory_space<vmem>>, vector<8x1xf32>
    %10 = vector.broadcast %9 : vector<8x1xf32> to vector<8x256xf32>
    %11 = arith.mulf %8, %10 : vector<8x256xf32>
    %12 = arith.addf %6, %11 : vector<8x256xf32>
    %c0_8 = arith.constant 0 : index
    %c0_9 = arith.constant 0 : index
    %c2 = arith.constant 2 : index
    %13 = vector.load %arg1[%c0_8, %c0_9, %c2] : memref<1x8x384xf32, #tpu.memory_space<vmem>>, vector<1x8x256xf32>
    %14 = vector.shape_cast %13 : vector<1x8x256xf32> to vector<8x256xf32>
    %c0_10 = arith.constant 0 : index
    %c2_11 = arith.constant 2 : index
    %15 = vector.load %arg2[%c0_10, %c2_11] : memref<8x9xf32, #tpu.memory_space<vmem>>, vector<8x1xf32>
    %16 = vector.broadcast %15 : vector<8x1xf32> to vector<8x256xf32>
    %17 = arith.mulf %14, %16 : vector<8x256xf32>
    %18 = arith.addf %12, %17 : vector<8x256xf32>
    %c0_12 = arith.constant 0 : index
    %c0_13 = arith.constant 0 : index
    %c16 = arith.constant 16 : index
    %19 = vector.load %arg1[%c0_12, %c0_13, %c16] : memref<1x8x384xf32, #tpu.memory_space<vmem>>, vector<1x8x256xf32>
    %20 = vector.shape_cast %19 : vector<1x8x256xf32> to vector<8x256xf32>
    %c0_14 = arith.constant 0 : index
    %c3 = arith.constant 3 : index
    %21 = vector.load %arg2[%c0_14, %c3] : memref<8x9xf32, #tpu.memory_space<vmem>>, vector<8x1xf32>
    %22 = vector.broadcast %21 : vector<8x1xf32> to vector<8x256xf32>
    %23 = arith.mulf %20, %22 : vector<8x256xf32>
    %24 = arith.addf %18, %23 : vector<8x256xf32>
    %c0_15 = arith.constant 0 : index
    %c0_16 = arith.constant 0 : index
    %c17 = arith.constant 17 : index
    %25 = vector.load %arg1[%c0_15, %c0_16, %c17] : memref<1x8x384xf32, #tpu.memory_space<vmem>>, vector<1x8x256xf32>
    %26 = vector.shape_cast %25 : vector<1x8x256xf32> to vector<8x256xf32>
    %c0_17 = arith.constant 0 : index
    %c4 = arith.constant 4 : index
    %27 = vector.load %arg2[%c0_17, %c4] : memref<8x9xf32, #tpu.memory_space<vmem>>, vector<8x1xf32>
    %28 = vector.broadcast %27 : vector<8x1xf32> to vector<8x256xf32>
    %29 = arith.mulf %26, %28 : vector<8x256xf32>
    %30 = arith.addf %24, %29 : vector<8x256xf32>
    %c0_18 = arith.constant 0 : index
    %c0_19 = arith.constant 0 : index
    %c18 = arith.constant 18 : index
    %31 = vector.load %arg1[%c0_18, %c0_19, %c18] : memref<1x8x384xf32, #tpu.memory_space<vmem>>, vector<1x8x256xf32>
    %32 = vector.shape_cast %31 : vector<1x8x256xf32> to vector<8x256xf32>
    %c0_20 = arith.constant 0 : index
    %c5 = arith.constant 5 : index
    %33 = vector.load %arg2[%c0_20, %c5] : memref<8x9xf32, #tpu.memory_space<vmem>>, vector<8x1xf32>
    %34 = vector.broadcast %33 : vector<8x1xf32> to vector<8x256xf32>
    %35 = arith.mulf %32, %34 : vector<8x256xf32>
    %36 = arith.addf %30, %35 : vector<8x256xf32>
    %c0_21 = arith.constant 0 : index
    %c0_22 = arith.constant 0 : index
    %c32 = arith.constant 32 : index
    %37 = vector.load %arg1[%c0_21, %c0_22, %c32] : memref<1x8x384xf32, #tpu.memory_space<vmem>>, vector<1x8x256xf32>
    %38 = vector.shape_cast %37 : vector<1x8x256xf32> to vector<8x256xf32>
    %c0_23 = arith.constant 0 : index
    %c6 = arith.constant 6 : index
    %39 = vector.load %arg2[%c0_23, %c6] : memref<8x9xf32, #tpu.memory_space<vmem>>, vector<8x1xf32>
    %40 = vector.broadcast %39 : vector<8x1xf32> to vector<8x256xf32>
    %41 = arith.mulf %38, %40 : vector<8x256xf32>
    %42 = arith.addf %36, %41 : vector<8x256xf32>
    %c0_24 = arith.constant 0 : index
    %c0_25 = arith.constant 0 : index
    %c33 = arith.constant 33 : index
    %43 = vector.load %arg1[%c0_24, %c0_25, %c33] : memref<1x8x384xf32, #tpu.memory_space<vmem>>, vector<1x8x256xf32>
    %44 = vector.shape_cast %43 : vector<1x8x256xf32> to vector<8x256xf32>
    %c0_26 = arith.constant 0 : index
    %c7 = arith.constant 7 : index
    %45 = vector.load %arg2[%c0_26, %c7] : memref<8x9xf32, #tpu.memory_space<vmem>>, vector<8x1xf32>
    %46 = vector.broadcast %45 : vector<8x1xf32> to vector<8x256xf32>
    %47 = arith.mulf %44, %46 : vector<8x256xf32>
    %48 = arith.addf %42, %47 : vector<8x256xf32>
    %c0_27 = arith.constant 0 : index
    %c0_28 = arith.constant 0 : index
    %c34 = arith.constant 34 : index
    %49 = vector.load %arg1[%c0_27, %c0_28, %c34] : memref<1x8x384xf32, #tpu.memory_space<vmem>>, vector<1x8x256xf32>
    %50 = vector.shape_cast %49 : vector<1x8x256xf32> to vector<8x256xf32>
    %c0_29 = arith.constant 0 : index
    %c8 = arith.constant 8 : index
    %51 = vector.load %arg2[%c0_29, %c8] : memref<8x9xf32, #tpu.memory_space<vmem>>, vector<8x1xf32>
    %52 = vector.broadcast %51 : vector<8x1xf32> to vector<8x256xf32>
    %53 = arith.mulf %50, %52 : vector<8x256xf32>
    %54 = arith.addf %48, %53 : vector<8x256xf32>
    %c0_30 = arith.constant 0 : index
    %c0_31 = arith.constant 0 : index
    %55 = vector.load %arg3[%c0_30, %c0_31] : memref<8x1xf32, #tpu.memory_space<vmem>>, vector<8x1xf32>
    %56 = vector.broadcast %55 : vector<8x1xf32> to vector<8x256xf32>
    %57 = arith.addf %54, %56 : vector<8x256xf32>
    %c0_32 = arith.constant 0 : index
    %c0_33 = arith.constant 0 : index
    %c0_34 = arith.constant 0 : index
    %58 = vector.load %arg4[%c0_32, %c0_33, %c0_34] : memref<1x8x256xf32, #tpu.memory_space<vmem>>, vector<1x8x256xf32>
    %59 = vector.shape_cast %58 : vector<1x8x256xf32> to vector<8x256xf32>
    %60 = vector.shape_cast %57 : vector<8x256xf32> to vector<1x8x256xf32>
    tpu.vector_store %arg4[%c0_32, %c0_33, %c0_34], %60 {strides = array<i32>} : memref<1x8x256xf32, #tpu.memory_space<vmem>>, vector<1x8x256xf32>,
    return
  }
  func.func @transform_0(%arg0: i32) -> (i32, i32, i32) {
    %c0_i32 = arith.constant 0 : i32
    %c0_i32_0 = arith.constant 0 : i32
    %c0_i32_1 = arith.constant 0 : i32
    return %arg0, %c0_i32, %c0_i32_0 : i32, i32, i32
  }
  func.func @transform_1(%arg0: i32) -> (i32, i32) {
    %c0_i32 = arith.constant 0 : i32
    %c0_i32_0 = arith.constant 0 : i32
    %c0_i32_1 = arith.constant 0 : i32
    return %c0_i32, %c0_i32_0 : i32, i32
  }
  func.func @transform_2(%arg0: i32) -> (i32, i32) {
    %c0_i32 = arith.constant 0 : i32
    %c0_i32_0 = arith.constant 0 : i32
    %c0_i32_1 = arith.constant 0 : i32
    return %c0_i32, %c0_i32_0 : i32, i32
  }
  func.func @transform_3(%arg0: i32) -> (i32, i32, i32) {
    %c0_i32 = arith.constant 0 : i32
    %c0_i32_0 = arith.constant 0 : i32
    %c0_i32_1 = arith.constant 0 : i32
    return %arg0, %c0_i32, %c0_i32_0 : i32, i32, i32
  }
}

</mosaic_0001>

<llo_original>
// kernel: tpu_custom_call.1
$region0: #{tpu_custom_call.1}
  #allocation0 [shape = 'u32[]', space=smem, size = 0x4, offset = 0x4, fixed_abs, tag = 'smem constant byte address 0x4 - core index']
  #allocation1 [shape = 'u32[144,128]{1,0:T(1,128)}', space=vmem, size = 0x12000, scoped, tag = 'internal scratch']
  %s0 = inlined_call_operand.hbm [shape: f32[2,8,384], index: 0, kind: input, shape index: {}]
  %s1 = inlined_call_operand.vmem [shape: f32[8,9], index: 1, kind: input, shape index: {}]
  %s2 = inlined_call_operand.vmem [shape: f32[8,1], index: 2, kind: input, shape index: {}]
  %s3 = inlined_call_operand.hbm [shape: f32[2,8,256], index: 3, kind: output, shape index: {}]
  %s4 = sld [smem:[#allocation0]]
  $region49: #{tpu_custom_call.1} parent=0
    _
  %s6 = ssub.s32 1, %s4
  %s7 = scalar_select 0, %s6, %s4
  $region1: #{tpu_custom_call.1} parent=0
    #allocation2 [shape = 'u8[24576]{0}', space=vmem, size = 0x6000, scoped, tag = 'input window, operand 0']
    #allocation3 [shape = 's32[2]{0}', space=sflag, size = 0x8, scoped, tag = 'scoped memory for tpu_custom_call.1']
    #allocation4 [shape = 's32[2]{0}', space=sflag, size = 0x8, scoped, tag = 'scoped memory for tpu_custom_call.1']
    #allocation5 [shape = 'u8[16384]{0}', space=vmem, size = 0x4000, scoped, tag = 'output window, operand 0']
    %8 = vsyncpa [#allocation3], 0
    %s9 = scalar_lea.sflag [#allocation3], 1
    %10 = vsyncpa %s9, 0
    %11 = vsyncpa [#allocation4], 0
    %s12 = scalar_lea.sflag [#allocation4], 1
    %13 = vsyncpa %s12, 0
    loop: start=0, step=1, limit=4
    $region2: #{tpu_custom_call.1} parent=1 // loop_pre_header
      _
    $region3: #{tpu_custom_call.1} parent=1 // loop_header
      %s15 = sphi 0, %s19
      %p16 = scmp.ge.s32.totalorder %s15, 4
      %s25 = sphi 0, %s27
      %s28 = sphi 0, %s25
      %s29 = sphi 0, %s28
      %s45 = sphi 0, %s29
      %s49 = sphi 0, %s49
      %s51 = sphi 0, %s49
      %s52 = sphi 0, %s51
      %s66 = sphi 0, %s52
      %s70 = sphi 0, %s70
      %s72 = sphi 0, %s70
      %s73 = sphi 0, %s72
      %s87 = sphi 0, %s73
      %s93 = sphi 0, %s95
      %s96 = sphi 0, %s93
      %s97 = sphi 0, %s96
      %s113 = sphi 0, %s97
    $region4: #{tpu_custom_call.1} parent=1 // loop_header_branch
      %18 = sbr.rel (%p16) target = $region8
    $region5: #{tpu_custom_call.1} parent=1 // loop_body
      %s20 = ssub.s32 %s15, 1
      %s21 = ssub.s32 %s15, 2
      %s22 = sadd.s32 %s15, 1
      %s23 = ssub.s32 %s15, %s22
      %p24 = scmp.eq.s32.totalorder %s23, 0
      %s26 = sadd.s32 %s25, 1
      %s27 = scalar_select %p24, %s25, %s26
      %p30 = pneg %p24
      %p31 = scmp.eq.s32.totalorder %s15, 1
      %p32 = por %p30, %p31
      %p33 = scmp.ne.s32.totalorder %s25, %s28
      %p34 = scmp.eq.s32.totalorder %s15, 0
      %p35 = por %p33, %p34
      %p36 = scmp.ne.s32.totalorder %s25, %s28
      %p37 = scmp.eq.s32.totalorder %s20, 1
      %p38 = por %p36, %p37
      %p39 = scmp.ne.s32.totalorder %s28, %s29
      %p40 = scmp.eq.s32.totalorder %s20, 0
      %p41 = por %p39, %p40
      %p42 = scmp.ne.s32.totalorder %s28, %s29
      %p43 = scmp.eq.s32.totalorder %s21, 1
      %p44 = por %p42, %p43
      %p46 = scmp.ne.s32.totalorder %s29, %s45
      %p47 = scmp.eq.s32.totalorder %s21, 0
      %p48 = por %p46, %p47
      %s50 = sadd.s32 %s49, 1
      %p53 = scmp.eq.s32.totalorder %s15, 1
      %p54 = scmp.ne.s32.totalorder %s49, %s51
      %p55 = scmp.eq.s32.totalorder %s15, 0
      %p56 = por %p54, %p55
      %p57 = scmp.ne.s32.totalorder %s49, %s51
      %p58 = scmp.eq.s32.totalorder %s20, 1
      %p59 = por %p57, %p58
      %p60 = scmp.ne.s32.totalorder %s51, %s52
      %p61 = scmp.eq.s32.totalorder %s20, 0
      %p62 = por %p60, %p61
      %p63 = scmp.ne.s32.totalorder %s51, %s52
      %p64 = scmp.eq.s32.totalorder %s21, 1
      %p65 = por %p63, %p64
      %p67 = scmp.ne.s32.totalorder %s52, %s66
      %p68 = scmp.eq.s32.totalorder %s21, 0
      %p69 = por %p67, %p68
      %s71 = sadd.s32 %s70, 1
      %p74 = scmp.eq.s32.totalorder %s15, 1
      %p75 = scmp.ne.s32.totalorder %s70, %s72
      %p76 = scmp.eq.s32.totalorder %s15, 0
      %p77 = por %p75, %p76
      %p78 = scmp.ne.s32.totalorder %s70, %s72
      %p79 = scmp.eq.s32.totalorder %s20, 1
      %p80 = por %p78, %p79
      %p81 = scmp.ne.s32.totalorder %s72, %s73
      %p82 = scmp.eq.s32.totalorder %s20, 0
      %p83 = por %p81, %p82
      %p84 = scmp.ne.s32.totalorder %s72, %s73
      %p85 = scmp.eq.s32.totalorder %s21, 1
      %p86 = por %p84, %p85
      %p88 = scmp.ne.s32.totalorder %s73, %s87
      %p89 = scmp.eq.s32.totalorder %s21, 0
      %p90 = por %p88, %p89
      %s91 = ssub.s32 %s15, %s22
      %p92 = scmp.eq.s32.totalorder %s91, 0
      %s94 = sadd.s32 %s93, 1
      %s95 = scalar_select %p92, %s93, %s94
      %p98 = pneg %p92
      %p99 = scmp.eq.s32.totalorder %s15, 1
      %p100 = por %p98, %p99
      %p101 = scmp.ne.s32.totalorder %s93, %s96
      %p102 = scmp.eq.s32.totalorder %s15, 0
      %p103 = por %p101, %p102
      %p104 = scmp.ne.s32.totalorder %s93, %s96
      %p105 = scmp.eq.s32.totalorder %s20, 1
      %p106 = por %p104, %p105
      %p107 = scmp.ne.s32.totalorder %s96, %s97
      %p108 = scmp.eq.s32.totalorder %s20, 0
      %p109 = por %p107, %p108
      %p110 = scmp.ne.s32.totalorder %s96, %s97
      %p111 = scmp.eq.s32.totalorder %s21, 1
      %p112 = por %p110, %p111
      %p114 = scmp.ne.s32.totalorder %s97, %s113
      %p115 = scmp.eq.s32.totalorder %s21, 0
      %p116 = por %p114, %p115
      %p117 = scmp.le.s32.totalorder 1, %s15
      %p118 = scmp.lt.s32.totalorder %s15, 3
      %p119 = pnand %p117, %p118
      %p120 = pneg %p119
      // Predicated region
      $region9: #{tpu_custom_call.1} parent=5 // pred_check
        _
      $region10: #{tpu_custom_call.1} parent=5 // pred_check_branch
        %122 = sbr.rel (%p119) target = $region12
      $region11: #{tpu_custom_call.1} parent=5 // pred_region
        %s123 = ssub.s32 %s15, 1
        // Predicated region
        $region13: #{tpu_custom_call.1} parent=11 // pred_check
          %p124 = pneg %p62
        $region14: #{tpu_custom_call.1} parent=11 // pred_check_branch
          %126 = sbr.rel (%p124) target = $region16
        $region15: #{tpu_custom_call.1} parent=11 // pred_region
          _
        $region16: #{tpu_custom_call.1} parent=11 // pred_fallthru
          _
        // Predicated region
        $region17: #{tpu_custom_call.1} parent=11 // pred_check
          %p127 = pneg %p83
        $region18: #{tpu_custom_call.1} parent=11 // pred_check_branch
          %129 = sbr.rel (%p127) target = $region20
        $region19: #{tpu_custom_call.1} parent=11 // pred_region
          _
        $region20: #{tpu_custom_call.1} parent=11 // pred_fallthru
          _
      $region12: #{tpu_custom_call.1} parent=5 // pred_fallthru
        _
      %p130 = scmp.lt.s32.totalorder %s15, 2
      // Predicated region
      $region21: #{tpu_custom_call.1} parent=5 // pred_check
        %p131 = pneg %p130
      $region22: #{tpu_custom_call.1} parent=5 // pred_check_branch
        %133 = sbr.rel (%p131) target = $region24
      $region23: #{tpu_custom_call.1} parent=5 // pred_region
        // Predicated region
        $region25: #{tpu_custom_call.1} parent=23 // pred_check
          %p134 = pneg %p35
        $region26: #{tpu_custom_call.1} parent=23 // pred_check_branch
          %136 = sbr.rel (%p134) target = $region28
        $region27: #{tpu_custom_call.1} parent=23 // pred_region
          %s137 = sand.u32 %s25, 1
          %s138 = scalar_lea.sflag [#allocation3], %s137
          %s139 = sand.u32 %s25, 1
          %s140 = smul.addr %s139, 24
          %s141 = scalar_lea.vmem [#allocation2], %s140
          %s143 = ssub.s32 384, 384
          %144 = vsyncadd %s138, %s143
          %s145 = smul.addr %s15, 3
          %s146 = smul.addr %s145, 128
          %s147 = scalar_lea.hbm %s0, %s146
          %s149 = sshll.u32 %s141, 4
          %s150 = int_to_ptr.vmem [resolvable:$true] %s149
          %152 = dma.hbm_to_vmem [thread:$0]  %s147, 384, %s150, %s138
        $region28: #{tpu_custom_call.1} parent=23 // pred_fallthru
          _
      $region24: #{tpu_custom_call.1} parent=5 // pred_fallthru
        _
      %p153 = scmp.le.s32.totalorder 1, %s15
      %p154 = scmp.lt.s32.totalorder %s15, 3
      %p155 = pnand %p153, %p154
      %p156 = pneg %p155
      // Predicated region
      $region29: #{tpu_custom_call.1} parent=5 // pred_check
        _
      $region30: #{tpu_custom_call.1} parent=5 // pred_check_branch
        %158 = sbr.rel (%p155) target = $region32
      $region31: #{tpu_custom_call.1} parent=5 // pred_region
        %s159 = ssub.s32 %s15, 1
        %s160 = sand.u32 %s28, 1
        %s161 = scalar_lea.sflag [#allocation3], %s160
        %s162 = sand.u32 %s28, 1
        %s163 = smul.addr %s162, 24
        %s164 = scalar_lea.vmem [#allocation2], %s163
        // Predicated region
        $region33: #{tpu_custom_call.1} parent=31 // pred_check
          %p165 = pneg %p41
        $region34: #{tpu_custom_call.1} parent=31 // pred_check_branch
          %167 = sbr.rel (%p165) target = $region36
        $region35: #{tpu_custom_call.1} parent=31 // pred_region
          %168 = dma.done %s161, 384
        $region36: #{tpu_custom_call.1} parent=31 // pred_fallthru
          _
        %s169 = sand.u32 %s28, 1
        %s170 = scalar_lea.sflag [#allocation3], %s169
        %s171 = sand.u32 %s28, 1
        %s172 = smul.addr %s171, 24
        %s173 = scalar_lea.vmem [#allocation2], %s172
        %p174 = pneg %p41
        %p175 = pneg %p38
        %p176 = pneg %p62
        %p177 = pneg %p59
        %p178 = pneg %p83
        %p179 = pneg %p80
        %p180 = pneg %p109
        %p181 = pneg %p106
        %s182 = sand.u32 %s96, 1
        %s183 = scalar_lea.sflag [#allocation4], %s182
        %s184 = sand.u32 %s96, 1
        %s185 = smul.addr %s184, 16
        %s186 = scalar_lea.vmem [#allocation5], %s185
        %v187 = vld [vmem:[%s164] sm:$0xff]
        %v188 = vld [vmem:[%s164 + $0x8] sm:$0xff]
        %v189 = vld [vmem:[%s1] sm:$0xff]
        %191 = vset.pattern.permute.xlu0 0
        %192 = vperm.xlu0 %191, %v189
        %v193 = vpop.permute.xlu0 %192
        %v195 = vmul.f32 %v187, %v193
        %v196 = vmul.f32 %v188, %v193
        %v197 = vadd.f32 %v195, 0.0
        %v198 = vadd.f32 %v196, 0.0
        %v199 = vld [vmem:[%s164] sm:$0xff]
        %v200 = vld [vmem:[%s164 + $0x8] sm:$0xff]
        %v201 = vld [vmem:[%s164 + $0x10] sm:$0xff]
        %202 = vset.pattern.permute.xlu0 1
        %203 = vperm.xlu0 %202, %v189
        %v204 = vpop.permute.xlu0 %203
        %v206 = vmul.f32 %v199, %v204
        %v207 = vmul.f32 %v200, %v204
        %v208 = vmul.f32 %v201, %v204
        %212 = vrot.lane.b32.xlu0 %v206, 127
        %v213 = vpop.permute.xlu0 %212
        %214 = vrot.lane.b32.xlu0 %v207, 127
        %v215 = vpop.permute.xlu0 %214
        %216 = vrot.lane.b32.xlu0 %v208, 127
        %v217 = vpop.permute.xlu0 %216
        %vm218 = vcmask 1039360
        %v219 = vsel %vm218, %v213, %v215
        %v220 = vsel %vm218, %v215, %v217
        %v223 = vadd.f32 %v197, %v219
        %v224 = vadd.f32 %v198, %v220
        %225 = vset.pattern.permute.xlu0 2
        %226 = vperm.xlu0 %225, %v189
        %v227 = vpop.permute.xlu0 %226
        %v229 = vmul.f32 %v199, %v227
        %v230 = vmul.f32 %v200, %v227
        %v231 = vmul.f32 %v201, %v227
        %235 = vrot.lane.b32.xlu0 %v229, 126
        %v236 = vpop.permute.xlu0 %235
        %237 = vrot.lane.b32.xlu0 %v230, 126
        %v238 = vpop.permute.xlu0 %237
        %239 = vrot.lane.b32.xlu0 %v231, 126
        %v240 = vpop.permute.xlu0 %239
        %vm241 = vcmask 1031168
        %v242 = vsel %vm241, %v236, %v238
        %v243 = vsel %vm241, %v238, %v240
        %v246 = vadd.f32 %v223, %v242
        %v247 = vadd.f32 %v224, %v243
        %248 = vset.pattern.permute.xlu0 3
        %249 = vperm.xlu0 %248, %v189
        %v250 = vpop.permute.xlu0 %249
        %v252 = vmul.f32 %v199, %v250
        %v253 = vmul.f32 %v200, %v250
        %v254 = vmul.f32 %v201, %v250
        %258 = vrot.lane.b32.xlu0 %v252, 112
        %v259 = vpop.permute.xlu0 %258
        %260 = vrot.lane.b32.xlu0 %v253, 112
        %v261 = vpop.permute.xlu0 %260
        %262 = vrot.lane.b32.xlu0 %v254, 112
        %v263 = vpop.permute.xlu0 %262
        %vm264 = vcmask 916480
        %v265 = vsel %vm264, %v259, %v261
        %v266 = vsel %vm264, %v261, %v263
        %v269 = vadd.f32 %v246, %v265
        %v270 = vadd.f32 %v247, %v266
        %271 = vset.pattern.permute.xlu0 4
        %272 = vperm.xlu0 %271, %v189
        %v273 = vpop.permute.xlu0 %272
        %v275 = vmul.f32 %v199, %v273
        %v276 = vmul.f32 %v200, %v273
        %v277 = vmul.f32 %v201, %v273
        %281 = vrot.lane.b32.xlu0 %v275, 111
        %v282 = vpop.permute.xlu0 %281
        %283 = vrot.lane.b32.xlu0 %v276, 111
        %v284 = vpop.permute.xlu0 %283
        %285 = vrot.lane.b32.xlu0 %v277, 111
        %v286 = vpop.permute.xlu0 %285
        %vm287 = vcmask 908288
        %v288 = vsel %vm287, %v282, %v284
        %v289 = vsel %vm287, %v284, %v286
        %v292 = vadd.f32 %v269, %v288
        %v293 = vadd.f32 %v270, %v289
        %294 = vset.pattern.permute.xlu0 5
        %295 = vperm.xlu0 %294, %v189
        %v296 = vpop.permute.xlu0 %295
        %v298 = vmul.f32 %v199, %v296
        %v299 = vmul.f32 %v200, %v296
        %v300 = vmul.f32 %v201, %v296
        %304 = vrot.lane.b32.xlu0 %v298, 110
        %v305 = vpop.permute.xlu0 %304
        %306 = vrot.lane.b32.xlu0 %v299, 110
        %v307 = vpop.permute.xlu0 %306
        %308 = vrot.lane.b32.xlu0 %v300, 110
        %v309 = vpop.permute.xlu0 %308
        %vm310 = vcmask 900096
        %v311 = vsel %vm310, %v305, %v307
        %v312 = vsel %vm310, %v307, %v309
        %v315 = vadd.f32 %v292, %v311
        %v316 = vadd.f32 %v293, %v312
        %317 = vset.pattern.permute.xlu0 6
        %318 = vperm.xlu0 %317, %v189
        %v319 = vpop.permute.xlu0 %318
        %v321 = vmul.f32 %v199, %v319
        %v322 = vmul.f32 %v200, %v319
        %v323 = vmul.f32 %v201, %v319
        %327 = vrot.lane.b32.xlu0 %v321, 96
        %v328 = vpop.permute.xlu0 %327
        %329 = vrot.lane.b32.xlu0 %v322, 96
        %v330 = vpop.permute.xlu0 %329
        %331 = vrot.lane.b32.xlu0 %v323, 96
        %v332 = vpop.permute.xlu0 %331
        %vm333 = vcmask 785408
        %v334 = vsel %vm333, %v328, %v330
        %v335 = vsel %vm333, %v330, %v332
        %v338 = vadd.f32 %v315, %v334
        %v339 = vadd.f32 %v316, %v335
        %340 = vset.pattern.permute.xlu0 7
        %341 = vperm.xlu0 %340, %v189
        %v342 = vpop.permute.xlu0 %341
        %v344 = vmul.f32 %v199, %v342
        %v345 = vmul.f32 %v200, %v342
        %v346 = vmul.f32 %v201, %v342
        %350 = vrot.lane.b32.xlu0 %v344, 95
        %v351 = vpop.permute.xlu0 %350
        %352 = vrot.lane.b32.xlu0 %v345, 95
        %v353 = vpop.permute.xlu0 %352
        %354 = vrot.lane.b32.xlu0 %v346, 95
        %v355 = vpop.permute.xlu0 %354
        %vm356 = vcmask 777216
        %v357 = vsel %vm356, %v351, %v353
        %v358 = vsel %vm356, %v353, %v355
        %v361 = vadd.f32 %v338, %v357
        %v362 = vadd.f32 %v339, %v358
        %363 = vset.pattern.permute.xlu0 8
        %364 = vperm.xlu0 %363, %v189
        %v365 = vpop.permute.xlu0 %364
        %v367 = vmul.f32 %v199, %v365
        %v368 = vmul.f32 %v200, %v365
        %v369 = vmul.f32 %v201, %v365
        %373 = vrot.lane.b32.xlu0 %v367, 94
        %v374 = vpop.permute.xlu0 %373
        %375 = vrot.lane.b32.xlu0 %v368, 94
        %v376 = vpop.permute.xlu0 %375
        %377 = vrot.lane.b32.xlu0 %v369, 94
        %v378 = vpop.permute.xlu0 %377
        %vm379 = vcmask 769024
        %v380 = vsel %vm379, %v374, %v376
        %v381 = vsel %vm379, %v376, %v378
        %v384 = vadd.f32 %v361, %v380
        %v385 = vadd.f32 %v362, %v381
        %v386 = vld [vmem:[%s2] sm:$0xff]
        %388 = vset.pattern.permute.xlu0 0
        %389 = vperm.xlu0 %388, %v386
        %v390 = vpop.permute.xlu0 %389
        %v392 = vadd.f32 %v384, %v390
        %v393 = vadd.f32 %v385, %v390
        %394 = vst [vmem:[%s186] sm:$0xff] %v392
        %395 = vst [vmem:[%s186 + $0x8] sm:$0xff] %v393
        %s396 = sand.u32 %s96, 1
        %s397 = scalar_lea.sflag [#allocation4], %s396
        %s398 = sand.u32 %s96, 1
        %s399 = smul.addr %s398, 16
        %s400 = scalar_lea.vmem [#allocation5], %s399
        // Predicated region
        $region37: #{tpu_custom_call.1} parent=31 // pred_check
          %p401 = pneg %p106
        $region38: #{tpu_custom_call.1} parent=31 // pred_check_branch
          %403 = sbr.rel (%p401) target = $region40
        $region39: #{tpu_custom_call.1} parent=31 // pred_region
          %s405 = ssub.s32 256, 256
          %406 = vsyncadd %s397, %s405
          %s407 = smul.addr %s20, 2
          %s408 = smul.addr %s407, 128
          %s409 = scalar_lea.hbm %s3, %s408
          %s411 = sshll.u32 %s400, 4
          %s412 = int_to_ptr.vmem [resolvable:$true] %s411
          %414 = dma.vmem_to_hbm [thread:$0]  %s412, 256, %s409, %s397
        $region40: #{tpu_custom_call.1} parent=31 // pred_fallthru
          _
      $region32: #{tpu_custom_call.1} parent=5 // pred_fallthru
        _
      %p415 = scmp.le.s32.totalorder 2, %s15
      // Predicated region
      $region41: #{tpu_custom_call.1} parent=5 // pred_check
        %p416 = pneg %p415
      $region42: #{tpu_custom_call.1} parent=5 // pred_check_branch
        %418 = sbr.rel (%p416) target = $region44
      $region43: #{tpu_custom_call.1} parent=5 // pred_region
        %s419 = ssub.s32 %s15, 2
        // Predicated region
        $region45: #{tpu_custom_call.1} parent=43 // pred_check
          %p420 = pneg %p112
        $region46: #{tpu_custom_call.1} parent=43 // pred_check_branch
          %422 = sbr.rel (%p420) target = $region48
        $region47: #{tpu_custom_call.1} parent=43 // pred_region
          %s423 = sand.u32 %s97, 1
          %s424 = scalar_lea.sflag [#allocation4], %s423
          %s425 = sand.u32 %s97, 1
          %s426 = smul.addr %s425, 16
          %s427 = scalar_lea.vmem [#allocation5], %s426
          %428 = dma.done %s424, 256
        $region48: #{tpu_custom_call.1} parent=43 // pred_fallthru
          _
      $region44: #{tpu_custom_call.1} parent=5 // pred_fallthru
        _
    $region6: #{tpu_custom_call.1} parent=1 // loop_footer
      %s19 = sadd.s32 1, %s15
    $region7: #{tpu_custom_call.1} parent=1 // loop_footer_branch
      %14 = sbr.rel target = $region3
    $region8: #{tpu_custom_call.1} parent=1 // loop_exit
      _
    %429 = vsyncpa [#allocation3], 1
    %s430 = scalar_lea.sflag [#allocation3], 1
    %431 = vsyncpa %s430, 1
    %432 = vsyncpa [#allocation4], 1
    %s433 = scalar_lea.sflag [#allocation4], 1
    %434 = vsyncpa %s433, 1

</llo_original>
